<compile_context>
chip_gen: v7x
topology: tpu7x:2x2x1
jax: 0.10.0
libtpu: 0.0.40
codegen_flags: <defaults>
</compile_context>

<pallas_src>
import jax
import jax.numpy as jnp
from jax.experimental import pallas as pl
from jax.experimental.pallas import tpu as pltpu

# ----------------------------- dimensions -----------------------------------
B = 2                      # batch
C, H, W = 4, 16, 16
D_IN = C * H * W           # 1024 flattened input features
FEAT_DIM = 32              # branch (Enhanced3DCNN stand-in) feature_dim
GLCM_DIM = 16              # GLCMModule stand-in feature width
LBP_DIM = 16               # LBPModule stand-in feature width
COMB_DIM = 2 * FEAT_DIM + GLCM_DIM + LBP_DIM   # 96 combined features
N_PACK = 128               # packed lane width (full vreg lane dimension)
AUX_ROWS = 8               # merged bias + fc operand rows ((8,128) tile)

# packed column layout: [ branch | glcm | lbp | const-1 | zero padding ]
_BR0, _BR1 = 0, FEAT_DIM                 # 0:32
_GL0, _GL1 = _BR1, _BR1 + GLCM_DIM       # 32:48
_LB0, _LB1 = _GL1, _GL1 + LBP_DIM        # 48:64
_CONST = _LB1                            # 64  (relu(0*x + 1) == 1 -> carries fc bias)


# ------------------------------ kernel ---------------------------------------
def siamese_kernel(face_ref, bg_ref, w_ref, aux_ref, o_ref):
    # TODO(synk): Enhanced3DCNN / GLCMModule / LBPModule definitions not
    # provided in the spec; each is modeled as flatten -> linear -> ReLU and
    # packed into the shared (D_IN, 128) weight (branch | glcm | lbp lanes).
    w = w_ref[...]                      # (D_IN, 128) bf16, VMEM-resident
    bias = aux_ref[0:1, :]              # (1, 128) f32 (incl. const-1 lane)
    wfc_face = aux_ref[1:2, :]          # (1, 128) fc weights for face lanes
    wfc_bg = aux_ref[2:3, :]            # (1, 128) fc weights for bg branch lanes

    # bf16 cast done in-kernel (no wrapper-side cast dispatch); f32 accumulate.
    face_x = face_ref[...].astype(jnp.bfloat16)
    bg_x = bg_ref[...].astype(jnp.bfloat16)

    # Two MXU passes against the shared resident RHS.
    # TODO(synk): for MXU-bound batches, stack face/bg rows into a >=256-row
    # LHS tile per pass to fill the 256-wide MXU on v6e/v7x.
    face_feats = jnp.maximum(
        jnp.dot(face_x, w, preferred_element_type=jnp.float32) + bias, 0.0)
    bg_feats = jnp.maximum(
        jnp.dot(bg_x, w, preferred_element_type=jnp.float32) + bias, 0.0)

    # fc_combined(cat([face, bg, glcm, lbp])) with /1.5 and bias folded into
    # the packed fc rows on the host.  No concat: partial lane reductions.
    logits = (jnp.sum(face_feats * wfc_face, axis=-1, keepdims=True)
              + jnp.sum(bg_feats * wfc_bg, axis=-1, keepdims=True))    # (tile, 1)

    # Numerically stable sigmoid (exp stays on EUP; exact divide, f32 epilogue).
    z = jnp.exp(-jnp.abs(logits))
    inv = 1.0 / (1.0 + z)
    sig = jnp.where(logits >= 0.0, inv, z * inv)

    # Lane-dense store; logical output is column 0.
    o_ref[...] = jnp.broadcast_to(sig, o_ref.shape)


# ------------------------------ wrapper ---------------------------------------
def _pick_row_tile(b):
    # Largest tile (multiple of 16 for bf16 sublane packing) dividing b;
    # otherwise fall back to the full batch (block == full dim is legal).
    for t in (256, 128, 64, 32, 16, 8):
        if b % t == 0:
            return t
    return b


@jax.jit
def siamese_forward(face_nchw, bg_nchw, packed):
    b = face_nchw.shape[0]
    face_flat = face_nchw.reshape(b, D_IN)          # free metadata reshape
    bg_flat = bg_nchw.reshape(b, D_IN)
    row_tile = _pick_row_tile(b)
    grid = (b // row_tile,)

    # VMEM budget (per step, double-buffered inputs): 2 * 2 * row_tile*D_IN*4B
    # + resident 256 KiB weight + (8,128) aux + row_tile*128*4B output — tiny,
    # well under every generation's scoped VMEM default; no vmem_limit needed.
    out = pl.pallas_call(
        siamese_kernel,
        out_shape=jax.ShapeDtypeStruct((b, N_PACK), jnp.float32),
        grid_spec=pltpu.PrefetchScalarGridSpec(
            num_scalar_prefetch=0,
            grid=grid,
            in_specs=[
                pl.BlockSpec((row_tile, D_IN), lambda i: (i, 0)),   # face rows
                pl.BlockSpec((row_tile, D_IN), lambda i: (i, 0)),   # bg rows
                pl.BlockSpec((D_IN, N_PACK), lambda i: (0, 0)),     # resident W
                pl.BlockSpec((AUX_ROWS, N_PACK), lambda i: (0, 0)), # resident aux
            ],
            out_specs=pl.BlockSpec((row_tile, N_PACK), lambda i: (i, 0)),
        ),
        compiler_params=pltpu.CompilerParams(
            dimension_semantics=("parallel",)),
        cost_estimate=pl.CostEstimate(
            flops=2 * (2 * b) * D_IN * N_PACK,
            transcendentals=b,
            bytes_accessed=(D_IN * N_PACK * 2            # bf16 weight
                            + 2 * b * D_IN * 4           # f32 inputs
                            + AUX_ROWS * N_PACK * 4      # aux
                            + b * N_PACK * 4)),          # output slab
    )(face_flat, bg_flat, packed["w"], packed["aux"])

    # Column-0 slice fuses into the same jitted executable (single dispatch).
    return out[:, :1]                                    # (B, 1)


# --------------------------- parameter init -----------------------------------
def init_params(key):
    ks = jax.random.split(key, 8)

    def linear_init(kw, kb, fan_in, fan_out):
        bound = 1.0 / jnp.sqrt(jnp.float32(fan_in))
        w = jax.random.uniform(kw, (fan_in, fan_out), jnp.float32, -bound, bound)
        b = jax.random.uniform(kb, (fan_out,), jnp.float32, -bound, bound)
        return w, b

    w_branch, b_branch = linear_init(ks[0], ks[1], D_IN, FEAT_DIM)
    w_glcm, b_glcm = linear_init(ks[2], ks[3], D_IN, GLCM_DIM)
    w_lbp, b_lbp = linear_init(ks[4], ks[5], D_IN, LBP_DIM)

    # fc_combined: lazily built Linear(COMB_DIM, 1) with weight *= 0.1
    bound = 1.0 / jnp.sqrt(jnp.float32(COMB_DIM))
    w_fc = jax.random.uniform(ks[6], (COMB_DIM,), jnp.float32, -bound, bound) * 0.1
    b_fc = jax.random.uniform(ks[7], (1,), jnp.float32, -bound, bound)

    return dict(w_branch=w_branch, b_branch=b_branch,
                w_glcm=w_glcm, b_glcm=b_glcm,
                w_lbp=w_lbp, b_lbp=b_lbp,
                w_fc=w_fc, b_fc=b_fc)


def pack_params(p):
    """Host-side (one-time) packing of weights for the fused kernel."""
    # Packed first-layer weight: (D_IN, 128), zero-padded lanes stay exactly 0
    # after ReLU (0 weight, 0 bias) so they cannot leak into the logit.
    w = jnp.zeros((D_IN, N_PACK), jnp.float32)
    w = w.at[:, _BR0:_BR1].set(p["w_branch"])
    w = w.at[:, _GL0:_GL1].set(p["w_glcm"])
    w = w.at[:, _LB0:_LB1].set(p["w_lbp"])

    # Merged aux operand, exact (8,128) tile:
    #   row 0: first-layer biases; lane _CONST is a constant-1 feature that
    #          carries the fc bias,
    #   row 1: fc_combined weights for the face lanes (branch|glcm|lbp|bias),
    #   row 2: fc_combined weights for the background branch lanes,
    #   rows 3..7: zero padding.
    # Reference combined order: [face_feat(32) | bg_feat(32) | glcm(16) | lbp(16)],
    # with the /1.5 logit scale and fc bias folded in.
    inv = 1.0 / 1.5
    w_fc = p["w_fc"]
    aux = jnp.zeros((AUX_ROWS, N_PACK), jnp.float32)
    aux = aux.at[0, _BR0:_BR1].set(p["b_branch"])
    aux = aux.at[0, _GL0:_GL1].set(p["b_glcm"])
    aux = aux.at[0, _LB0:_LB1].set(p["b_lbp"])
    aux = aux.at[0, _CONST].set(1.0)
    aux = aux.at[1, _BR0:_BR1].set(w_fc[0:FEAT_DIM] * inv)                     # face branch
    aux = aux.at[1, _GL0:_GL1].set(w_fc[2 * FEAT_DIM:2 * FEAT_DIM + GLCM_DIM] * inv)
    aux = aux.at[1, _LB0:_LB1].set(w_fc[2 * FEAT_DIM + GLCM_DIM:COMB_DIM] * inv)
    aux = aux.at[1, _CONST].set(p["b_fc"][0] * inv)                            # fc bias via const lane
    aux = aux.at[2, _BR0:_BR1].set(w_fc[FEAT_DIM:2 * FEAT_DIM] * inv)          # background branch

    # bf16 weight halves the dominant weight-DMA traffic; f32 accumulation.
    # TODO(synk): on v7x, fp8 weight + per-lane scales would halve it again if
    # the weight cannot be kept VMEM-resident.
    return dict(w=w.astype(jnp.bfloat16), aux=aux)


if __name__ == "__main__":
    key = jax.random.PRNGKey(0)
    k_face, k_bg, k_params = jax.random.split(key, 3)

    face_input = jax.random.normal(k_face, (B, C, H, W), jnp.float32)
    background_input = jax.random.normal(k_bg, (B, C, H, W), jnp.float32)
    params = init_params(k_params)
    packed = pack_params(params)

    out = siamese_forward(face_input, background_input, packed)
    out = jax.block_until_ready(out)

    assert out.shape == (B, 1)
    assert bool(jnp.all(jnp.isfinite(out)))
    assert bool(jnp.all((out > 0.0) & (out < 1.0)))
    print("KERNEL_OK")
</pallas_src>

<mosaic_0001>
module attributes {stable_mosaic.version = 11 : i64} {
  func.func @siamese_kernel(%arg0: i32, %arg1: memref<2x1024xf32, #tpu.memory_space<vmem>>, %arg2: memref<2x1024xf32, #tpu.memory_space<vmem>>, %arg3: memref<1024x128xbf16, #tpu.memory_space<vmem>>, %arg4: memref<8x128xf32, #tpu.memory_space<vmem>>, %arg5: memref<2x128xf32, #tpu.memory_space<vmem>>) attributes {dimension_semantics = [#tpu.dimension_semantics<parallel>], iteration_bounds = array<i64: 1>, scalar_prefetch = 0 : i64, scratch_operands = 0 : i64, tpu.core_type = #tpu.core_type<tc>, window_params = [{transform_indices = @transform_0, window_bounds = array<i64: 2, 1024>}, {transform_indices = @transform_1, window_bounds = array<i64: 2, 1024>}, {pipeline_mode = #tpu.pipeline_mode<synchronous>, transform_indices = @transform_2, window_bounds = array<i64: 1024, 128>}, {pipeline_mode = #tpu.pipeline_mode<synchronous>, transform_indices = @transform_3, window_bounds = array<i64: 8, 128>}, {transform_indices = @transform_4, window_bounds = array<i64: 2, 128>}]} {
    %c0 = arith.constant 0 : index
    %c0_0 = arith.constant 0 : index
    %0 = vector.load %arg3[%c0, %c0_0] : memref<1024x128xbf16, #tpu.memory_space<vmem>>, vector<1024x128xbf16>
    %c0_1 = arith.constant 0 : index
    %c0_2 = arith.constant 0 : index
    %1 = vector.load %arg4[%c0_1, %c0_2] : memref<8x128xf32, #tpu.memory_space<vmem>>, vector<1x128xf32>
    %c1 = arith.constant 1 : index
    %c0_3 = arith.constant 0 : index
    %2 = vector.load %arg4[%c1, %c0_3] : memref<8x128xf32, #tpu.memory_space<vmem>>, vector<1x128xf32>
    %c2 = arith.constant 2 : index
    %c0_4 = arith.constant 0 : index
    %3 = vector.load %arg4[%c2, %c0_4] : memref<8x128xf32, #tpu.memory_space<vmem>>, vector<1x128xf32>
    %c0_5 = arith.constant 0 : index
    %c0_6 = arith.constant 0 : index
    %4 = vector.load %arg1[%c0_5, %c0_6] : memref<2x1024xf32, #tpu.memory_space<vmem>>, vector<2x1024xf32>
    %5 = arith.truncf %4 : vector<2x1024xf32> to vector<2x1024xbf16>
    %c0_7 = arith.constant 0 : index
    %c0_8 = arith.constant 0 : index
    %6 = vector.load %arg2[%c0_7, %c0_8] : memref<2x1024xf32, #tpu.memory_space<vmem>>, vector<2x1024xf32>
    %7 = arith.truncf %6 : vector<2x1024xf32> to vector<2x1024xbf16>
    %cst = arith.constant dense<0.000000e+00> : vector<2x128xf32>
    %8 = tpu.matmul %5, %0, %cst {dimension_numbers = #tpu.dot_dimension_numbers<[1], [0], [0], [1], [0, 0, 1, 1], [], []>} : vector<2x1024xbf16>, vector<1024x128xbf16>, vector<2x128xf32> -> vector<2x128xf32>
    %9 = vector.broadcast %1 : vector<1x128xf32> to vector<2x128xf32>
    %10 = arith.addf %8, %9 : vector<2x128xf32>
    %cst_9 = arith.constant 0.000000e+00 : f32
    %11 = vector.broadcast %cst_9 : f32 to vector<2x128xf32>
    %12 = arith.maximumf %10, %11 : vector<2x128xf32>
    %cst_10 = arith.constant dense<0.000000e+00> : vector<2x128xf32>
    %13 = tpu.matmul %7, %0, %cst_10 {dimension_numbers = #tpu.dot_dimension_numbers<[1], [0], [0], [1], [0, 0, 1, 1], [], []>} : vector<2x1024xbf16>, vector<1024x128xbf16>, vector<2x128xf32> -> vector<2x128xf32>
    %14 = vector.broadcast %1 : vector<1x128xf32> to vector<2x128xf32>
    %15 = arith.addf %13, %14 : vector<2x128xf32>
    %cst_11 = arith.constant 0.000000e+00 : f32
    %16 = vector.broadcast %cst_11 : f32 to vector<2x128xf32>
    %17 = arith.maximumf %15, %16 : vector<2x128xf32>
    %18 = vector.broadcast %2 : vector<1x128xf32> to vector<2x128xf32>
    %19 = arith.mulf %12, %18 : vector<2x128xf32>
    %cst_12 = arith.constant dense<0.000000e+00> : vector<2xf32>
    %20 = vector.multi_reduction <add>, %19, %cst_12 [1] : vector<2x128xf32> to vector<2xf32>
    %21 = vector.shape_cast %20 : vector<2xf32> to vector<2x1xf32>
    %22 = vector.broadcast %3 : vector<1x128xf32> to vector<2x128xf32>
    %23 = arith.mulf %17, %22 : vector<2x128xf32>
    %cst_13 = arith.constant dense<0.000000e+00> : vector<2xf32>
    %24 = vector.multi_reduction <add>, %23, %cst_13 [1] : vector<2x128xf32> to vector<2xf32>
    %25 = vector.shape_cast %24 : vector<2xf32> to vector<2x1xf32>
    %26 = arith.addf %21, %25 : vector<2x1xf32>
    %27 = math.absf %26 : vector<2x1xf32>
    %cst_14 = arith.constant 0.000000e+00 : f32
    %28 = vector.broadcast %cst_14 : f32 to vector<2x1xf32>
    %29 = arith.subf %28, %27 : vector<2x1xf32>
    %30 = math.exp %29 : vector<2x1xf32>
    %cst_15 = arith.constant 1.000000e+00 : f32
    %31 = vector.broadcast %cst_15 : f32 to vector<2x1xf32>
    %32 = arith.addf %31, %30 : vector<2x1xf32>
    %cst_16 = arith.constant 1.000000e+00 : f32
    %33 = vector.broadcast %cst_16 : f32 to vector<2x1xf32>
    %34 = arith.divf %33, %32 : vector<2x1xf32>
    %cst_17 = arith.constant 0.000000e+00 : f32
    %35 = vector.broadcast %cst_17 : f32 to vector<2x1xf32>
    %36 = arith.cmpf oge, %26, %35 : vector<2x1xf32>
    %37 = arith.mulf %30, %34 : vector<2x1xf32>
    %38 = arith.select %36, %34, %37 : vector<2x1xi1>, vector<2x1xf32>
    %39 = vector.shape_cast %38 : vector<2x1xf32> to vector<2x1xf32>
    %40 = vector.broadcast %39 : vector<2x1xf32> to vector<2x128xf32>
    %c0_18 = arith.constant 0 : index
    %c0_19 = arith.constant 0 : index
    %41 = vector.load %arg5[%c0_18, %c0_19] : memref<2x128xf32, #tpu.memory_space<vmem>>, vector<2x128xf32>
    tpu.vector_store %arg5[%c0_18, %c0_19], %40 {strides = array<i32>} : memref<2x128xf32, #tpu.memory_space<vmem>>, vector<2x128xf32>,
    return
  }
  func.func @transform_0(%arg0: i32) -> (i32, i32) {
    %c0_i32 = arith.constant 0 : i32
    %c0_i32_0 = arith.constant 0 : i32
    return %arg0, %c0_i32 : i32, i32
  }
  func.func @transform_1(%arg0: i32) -> (i32, i32) {
    %c0_i32 = arith.constant 0 : i32
    %c0_i32_0 = arith.constant 0 : i32
    return %arg0, %c0_i32 : i32, i32
  }
  func.func @transform_2(%arg0: i32) -> (i32, i32) {
    %c0_i32 = arith.constant 0 : i32
    %c0_i32_0 = arith.constant 0 : i32
    %c0_i32_1 = arith.constant 0 : i32
    return %c0_i32, %c0_i32_0 : i32, i32
  }
  func.func @transform_3(%arg0: i32) -> (i32, i32) {
    %c0_i32 = arith.constant 0 : i32
    %c0_i32_0 = arith.constant 0 : i32
    %c0_i32_1 = arith.constant 0 : i32
    return %c0_i32, %c0_i32_0 : i32, i32
  }
  func.func @transform_4(%arg0: i32) -> (i32, i32) {
    %c0_i32 = arith.constant 0 : i32
    %c0_i32_0 = arith.constant 0 : i32
    return %arg0, %c0_i32 : i32, i32
  }
}

</mosaic_0001>

<llo_original>
// kernel: siamese_forward.1
$region0: #{siamese_forward.1}
  #allocation0 [shape = 'u32[]', space=smem, size = 0x4, offset = 0x4, fixed_abs, tag = 'smem constant byte address 0x4 - core index']
  #allocation1 [shape = 'u32[144,128]{1,0:T(1,128)}', space=vmem, size = 0x12000, scoped, tag = 'internal scratch']
  %s0 = inlined_call_operand.vmem [shape: f32[2,1024], index: 0, kind: input, shape index: {}]
  %s1 = inlined_call_operand.vmem [shape: f32[2,1024], index: 1, kind: input, shape index: {}]
  %s2 = inlined_call_operand.hbm [shape: bf16[1024,128], index: 2, kind: input, shape index: {}]
  %s3 = inlined_call_operand.vmem [shape: f32[8,128], index: 3, kind: input, shape index: {}]
  %s4 = inlined_call_operand.vmem [shape: f32[2,128], index: 4, kind: output, shape index: {}]
  %s5 = sld [smem:[#allocation0]]
  $region30: #{siamese_forward.1} parent=0
    _
  %s7 = ssub.s32 1, %s5
  %s8 = scalar_select 0, %s7, %s5
  $region1: #{siamese_forward.1} parent=0
    #allocation2 [shape = 'u8[262144]{0}', space=vmem, size = 0x40000, scoped, tag = 'input window, operand 2, single buffered']
    #allocation3 [shape = 's32[1]{0}', space=sflag, size = 0x4, scoped, tag = 'scoped memory for siamese_forward.1']
    %9 = vsyncpa [#allocation3], 0
    // Predicated region
    $region2: #{siamese_forward.1} parent=1 // pred_check
      _
    $region3: #{siamese_forward.1} parent=1 // pred_check_branch
      %11 = sbr.rel (0) target = $region5
    $region4: #{siamese_forward.1} parent=1 // pred_region
      _
    $region5: #{siamese_forward.1} parent=1 // pred_fallthru
      _
    // Predicated region
    $region6: #{siamese_forward.1} parent=1 // pred_check
      _
    $region7: #{siamese_forward.1} parent=1 // pred_check_branch
      %13 = sbr.rel (0) target = $region9
    $region8: #{siamese_forward.1} parent=1 // pred_region
      _
    $region9: #{siamese_forward.1} parent=1 // pred_fallthru
      _
    // Predicated region
    $region10: #{siamese_forward.1} parent=1 // pred_check
      _
    $region11: #{siamese_forward.1} parent=1 // pred_check_branch
      %15 = sbr.rel (0) target = $region13
    $region12: #{siamese_forward.1} parent=1 // pred_region
      %s17 = ssub.s32 8192, 8192
      %18 = vsyncadd [#allocation3], %s17
      %s19 = sshll.u32 [#allocation2], 4
      %s20 = int_to_ptr.vmem [resolvable:$true] %s19
      %25 = dma.hbm_to_vmem [thread:$0]  %s2, 8192, %s20, [#allocation3], 64, 64, 4
    $region13: #{siamese_forward.1} parent=1 // pred_fallthru
      _
    // Predicated region
    $region14: #{siamese_forward.1} parent=1 // pred_check
      _
    $region15: #{siamese_forward.1} parent=1 // pred_check_branch
      %27 = sbr.rel (0) target = $region17
    $region16: #{siamese_forward.1} parent=1 // pred_region
      _
    $region17: #{siamese_forward.1} parent=1 // pred_fallthru
      _
    // Predicated region
    $region18: #{siamese_forward.1} parent=1 // pred_check
      _
    $region19: #{siamese_forward.1} parent=1 // pred_check_branch
      %29 = sbr.rel (0) target = $region21
    $region20: #{siamese_forward.1} parent=1 // pred_region
      %30 = dma.done [#allocation3], 8192
    $region21: #{siamese_forward.1} parent=1 // pred_fallthru
      _
    %v32 = vld [vmem:[#allocation2] sm:$0xf]
    %v33 = vld [vmem:[#allocation2 + $0x4] sm:$0xf]
    %v34 = vld [vmem:[#allocation2 + $0x8] sm:$0xf]
    %v35 = vld [vmem:[#allocation2 + $0xc] sm:$0xf]
    %v36 = vld [vmem:[#allocation2 + $0x10] sm:$0xf]
    %v37 = vld [vmem:[#allocation2 + $0x14] sm:$0xf]
    %v38 = vld [vmem:[#allocation2 + $0x18] sm:$0xf]
    %v39 = vld [vmem:[#allocation2 + $0x1c] sm:$0xf]
    %v40 = vld [vmem:[#allocation2 + $0x20] sm:$0xf]
    %v41 = vld [vmem:[#allocation2 + $0x24] sm:$0xf]
    %v42 = vld [vmem:[#allocation2 + $0x28] sm:$0xf]
    %v43 = vld [vmem:[#allocation2 + $0x2c] sm:$0xf]
    %v44 = vld [vmem:[#allocation2 + $0x30] sm:$0xf]
    %v45 = vld [vmem:[#allocation2 + $0x34] sm:$0xf]
    %v46 = vld [vmem:[#allocation2 + $0x38] sm:$0xf]
    %v47 = vld [vmem:[#allocation2 + $0x3c] sm:$0xf]
    %v48 = vld [vmem:[#allocation2 + $0x40] sm:$0xf]
    %v49 = vld [vmem:[#allocation2 + $0x44] sm:$0xf]
    %v50 = vld [vmem:[#allocation2 + $0x48] sm:$0xf]
    %v51 = vld [vmem:[#allocation2 + $0x4c] sm:$0xf]
    %v52 = vld [vmem:[#allocation2 + $0x50] sm:$0xf]
    %v53 = vld [vmem:[#allocation2 + $0x54] sm:$0xf]
    %v54 = vld [vmem:[#allocation2 + $0x58] sm:$0xf]
    %v55 = vld [vmem:[#allocation2 + $0x5c] sm:$0xf]
    %v56 = vld [vmem:[#allocation2 + $0x60] sm:$0xf]
    %v57 = vld [vmem:[#allocation2 + $0x64] sm:$0xf]
    %v58 = vld [vmem:[#allocation2 + $0x68] sm:$0xf]
    %v59 = vld [vmem:[#allocation2 + $0x6c] sm:$0xf]
    %v60 = vld [vmem:[#allocation2 + $0x70] sm:$0xf]
    %v61 = vld [vmem:[#allocation2 + $0x74] sm:$0xf]
    %v62 = vld [vmem:[#allocation2 + $0x78] sm:$0xf]
    %v63 = vld [vmem:[#allocation2 + $0x7c] sm:$0xf]
    %v64 = vld [vmem:[#allocation2 + $0x80] sm:$0xf]
    %v65 = vld [vmem:[#allocation2 + $0x84] sm:$0xf]
    %v66 = vld [vmem:[#allocation2 + $0x88] sm:$0xf]
    %v67 = vld [vmem:[#allocation2 + $0x8c] sm:$0xf]
    %v68 = vld [vmem:[#allocation2 + $0x90] sm:$0xf]
    %v69 = vld [vmem:[#allocation2 + $0x94] sm:$0xf]
    %v70 = vld [vmem:[#allocation2 + $0x98] sm:$0xf]
    %v71 = vld [vmem:[#allocation2 + $0x9c] sm:$0xf]
    %v72 = vld [vmem:[#allocation2 + $0xa0] sm:$0xf]
    %v73 = vld [vmem:[#allocation2 + $0xa4] sm:$0xf]
    %v74 = vld [vmem:[#allocation2 + $0xa8] sm:$0xf]
    %v75 = vld [vmem:[#allocation2 + $0xac] sm:$0xf]
    %v76 = vld [vmem:[#allocation2 + $0xb0] sm:$0xf]
    %v77 = vld [vmem:[#allocation2 + $0xb4] sm:$0xf]
    %v78 = vld [vmem:[#allocation2 + $0xb8] sm:$0xf]
    %v79 = vld [vmem:[#allocation2 + $0xbc] sm:$0xf]
    %v80 = vld [vmem:[#allocation2 + $0xc0] sm:$0xf]
    %v81 = vld [vmem:[#allocation2 + $0xc4] sm:$0xf]
    %v82 = vld [vmem:[#allocation2 + $0xc8] sm:$0xf]
    %v83 = vld [vmem:[#allocation2 + $0xcc] sm:$0xf]
    %v84 = vld [vmem:[#allocation2 + $0xd0] sm:$0xf]
    %v85 = vld [vmem:[#allocation2 + $0xd4] sm:$0xf]
    %v86 = vld [vmem:[#allocation2 + $0xd8] sm:$0xf]
    %v87 = vld [vmem:[#allocation2 + $0xdc] sm:$0xf]
    %v88 = vld [vmem:[#allocation2 + $0xe0] sm:$0xf]
    %v89 = vld [vmem:[#allocation2 + $0xe4] sm:$0xf]
    %v90 = vld [vmem:[#allocation2 + $0xe8] sm:$0xf]
    %v91 = vld [vmem:[#allocation2 + $0xec] sm:$0xf]
    %v92 = vld [vmem:[#allocation2 + $0xf0] sm:$0xf]
    %v93 = vld [vmem:[#allocation2 + $0xf4] sm:$0xf]
    %v94 = vld [vmem:[#allocation2 + $0xf8] sm:$0xf]
    %v95 = vld [vmem:[#allocation2 + $0xfc] sm:$0xf]
    %v96 = vld [vmem:[#allocation2 + $0x100] sm:$0xf]
    %v97 = vld [vmem:[#allocation2 + $0x104] sm:$0xf]
    %v98 = vld [vmem:[#allocation2 + $0x108] sm:$0xf]
    %v99 = vld [vmem:[#allocation2 + $0x10c] sm:$0xf]
    %v100 = vld [vmem:[#allocation2 + $0x110] sm:$0xf]
    %v101 = vld [vmem:[#allocation2 + $0x114] sm:$0xf]
    %v102 = vld [vmem:[#allocation2 + $0x118] sm:$0xf]
    %v103 = vld [vmem:[#allocation2 + $0x11c] sm:$0xf]
    %v104 = vld [vmem:[#allocation2 + $0x120] sm:$0xf]
    %v105 = vld [vmem:[#allocation2 + $0x124] sm:$0xf]
    %v106 = vld [vmem:[#allocation2 + $0x128] sm:$0xf]
    %v107 = vld [vmem:[#allocation2 + $0x12c] sm:$0xf]
    %v108 = vld [vmem:[#allocation2 + $0x130] sm:$0xf]
    %v109 = vld [vmem:[#allocation2 + $0x134] sm:$0xf]
    %v110 = vld [vmem:[#allocation2 + $0x138] sm:$0xf]
    %v111 = vld [vmem:[#allocation2 + $0x13c] sm:$0xf]
    %v112 = vld [vmem:[#allocation2 + $0x140] sm:$0xf]
    %v113 = vld [vmem:[#allocation2 + $0x144] sm:$0xf]
    %v114 = vld [vmem:[#allocation2 + $0x148] sm:$0xf]
    %v115 = vld [vmem:[#allocation2 + $0x14c] sm:$0xf]
    %v116 = vld [vmem:[#allocation2 + $0x150] sm:$0xf]
    %v117 = vld [vmem:[#allocation2 + $0x154] sm:$0xf]
    %v118 = vld [vmem:[#allocation2 + $0x158] sm:$0xf]
    %v119 = vld [vmem:[#allocation2 + $0x15c] sm:$0xf]
    %v120 = vld [vmem:[#allocation2 + $0x160] sm:$0xf]
    %v121 = vld [vmem:[#allocation2 + $0x164] sm:$0xf]
    %v122 = vld [vmem:[#allocation2 + $0x168] sm:$0xf]
    %v123 = vld [vmem:[#allocation2 + $0x16c] sm:$0xf]
    %v124 = vld [vmem:[#allocation2 + $0x170] sm:$0xf]
    %v125 = vld [vmem:[#allocation2 + $0x174] sm:$0xf]
    %v126 = vld [vmem:[#allocation2 + $0x178] sm:$0xf]
    %v127 = vld [vmem:[#allocation2 + $0x17c] sm:$0xf]
    %v128 = vld [vmem:[#allocation2 + $0x180] sm:$0xf]
    %v129 = vld [vmem:[#allocation2 + $0x184] sm:$0xf]
    %v130 = vld [vmem:[#allocation2 + $0x188] sm:$0xf]
    %v131 = vld [vmem:[#allocation2 + $0x18c] sm:$0xf]
    %v132 = vld [vmem:[#allocation2 + $0x190] sm:$0xf]
    %v133 = vld [vmem:[#allocation2 + $0x194] sm:$0xf]
    %v134 = vld [vmem:[#allocation2 + $0x198] sm:$0xf]
    %v135 = vld [vmem:[#allocation2 + $0x19c] sm:$0xf]
    %v136 = vld [vmem:[#allocation2 + $0x1a0] sm:$0xf]
    %v137 = vld [vmem:[#allocation2 + $0x1a4] sm:$0xf]
    %v138 = vld [vmem:[#allocation2 + $0x1a8] sm:$0xf]
    %v139 = vld [vmem:[#allocation2 + $0x1ac] sm:$0xf]
    %v140 = vld [vmem:[#allocation2 + $0x1b0] sm:$0xf]
    %v141 = vld [vmem:[#allocation2 + $0x1b4] sm:$0xf]
    %v142 = vld [vmem:[#allocation2 + $0x1b8] sm:$0xf]
    %v143 = vld [vmem:[#allocation2 + $0x1bc] sm:$0xf]
    %v144 = vld [vmem:[#allocation2 + $0x1c0] sm:$0xf]
    %v145 = vld [vmem:[#allocation2 + $0x1c4] sm:$0xf]
    %v146 = vld [vmem:[#allocation2 + $0x1c8] sm:$0xf]
    %v147 = vld [vmem:[#allocation2 + $0x1cc] sm:$0xf]
    %v148 = vld [vmem:[#allocation2 + $0x1d0] sm:$0xf]
    %v149 = vld [vmem:[#allocation2 + $0x1d4] sm:$0xf]
    %v150 = vld [vmem:[#allocation2 + $0x1d8] sm:$0xf]
    %v151 = vld [vmem:[#allocation2 + $0x1dc] sm:$0xf]
    %v152 = vld [vmem:[#allocation2 + $0x1e0] sm:$0xf]
    %v153 = vld [vmem:[#allocation2 + $0x1e4] sm:$0xf]
    %v154 = vld [vmem:[#allocation2 + $0x1e8] sm:$0xf]
    %v155 = vld [vmem:[#allocation2 + $0x1ec] sm:$0xf]
    %v156 = vld [vmem:[#allocation2 + $0x1f0] sm:$0xf]
    %v157 = vld [vmem:[#allocation2 + $0x1f4] sm:$0xf]
    %v158 = vld [vmem:[#allocation2 + $0x1f8] sm:$0xf]
    %v159 = vld [vmem:[#allocation2 + $0x1fc] sm:$0xf]
    %v160 = vld [vmem:[%s3] sm:$0x1]
    %v161 = vld [vmem:[%s3 + $0x1] sm:$0x1]
    %v162 = vld [vmem:[%s3 + $0x2] sm:$0x1]
    %v163 = vld [vmem:[%s0] sm:$0xff]
    %v164 = vld [vmem:[%s0 + $0x8] sm:$0xff]
    %v167 = vcombine.high %v163, %v163
    %v169 = vunpack.c.l.s4 1983009808
    %v170 = vunpack.c.0.s8 %v169
    %v171 = vlaneseq
    %v172 = vshrl.u32 %v171, 7
    %v173 = vsub.s32 %v170, %v172
    %v174 = vrot.slane %v163, %v173
    %v176 = vunpack.c.l.s4 1983009808
    %v177 = vunpack.c.0.s8 %v176
    %v178 = vlaneseq
    %v179 = vshrl.u32 %v178, 7
    %v180 = vsub.s32 %v177, %v179
    %v181 = vrot.slane %v167, %v180
    %v182 = vcombine.high %v174, %v174
    %v183 = vcombine.high %v181, %v181
    %v184 = vcombine.high %v164, %v164
    %v186 = vunpack.c.l.s4 1983009808
    %v187 = vunpack.c.0.s8 %v186
    %v188 = vlaneseq
    %v189 = vshrl.u32 %v188, 7
    %v190 = vsub.s32 %v187, %v189
    %v191 = vrot.slane %v164, %v190
    %v193 = vunpack.c.l.s4 1983009808
    %v194 = vunpack.c.0.s8 %v193
    %v195 = vlaneseq
    %v196 = vshrl.u32 %v195, 7
    %v197 = vsub.s32 %v194, %v196
    %v198 = vrot.slane %v184, %v197
    %v199 = vcombine.high %v191, %v191
    %v200 = vcombine.high %v198, %v198
    %v209 = vpack.c.bf16 %v174, %v174
    %v210 = vpack.c.bf16 %v182, %v182
    %v211 = vpack.c.bf16 %v181, %v181
    %v212 = vpack.c.bf16 %v183, %v183
    %v213 = vpack.c.bf16 %v191, %v191
    %v214 = vpack.c.bf16 %v199, %v199
    %v215 = vpack.c.bf16 %v198, %v198
    %v216 = vpack.c.bf16 %v200, %v200
    %v217 = vld [vmem:[%s1] sm:$0xff]
    %v218 = vld [vmem:[%s1 + $0x8] sm:$0xff]
    %v221 = vcombine.high %v217, %v217
    %v223 = vunpack.c.l.s4 1983009808
    %v224 = vunpack.c.0.s8 %v223
    %v225 = vlaneseq
    %v226 = vshrl.u32 %v225, 7
    %v227 = vsub.s32 %v224, %v226
    %v228 = vrot.slane %v217, %v227
    %v230 = vunpack.c.l.s4 1983009808
    %v231 = vunpack.c.0.s8 %v230
    %v232 = vlaneseq
    %v233 = vshrl.u32 %v232, 7
    %v234 = vsub.s32 %v231, %v233
    %v235 = vrot.slane %v221, %v234
    %v236 = vcombine.high %v228, %v228
    %v237 = vcombine.high %v235, %v235
    %v238 = vcombine.high %v218, %v218
    %v240 = vunpack.c.l.s4 1983009808
    %v241 = vunpack.c.0.s8 %v240
    %v242 = vlaneseq
    %v243 = vshrl.u32 %v242, 7
    %v244 = vsub.s32 %v241, %v243
    %v245 = vrot.slane %v218, %v244
    %v247 = vunpack.c.l.s4 1983009808
    %v248 = vunpack.c.0.s8 %v247
    %v249 = vlaneseq
    %v250 = vshrl.u32 %v249, 7
    %v251 = vsub.s32 %v248, %v250
    %v252 = vrot.slane %v238, %v251
    %v253 = vcombine.high %v245, %v245
    %v254 = vcombine.high %v252, %v252
    %v263 = vpack.c.bf16 %v228, %v228
    %v264 = vpack.c.bf16 %v236, %v236
    %v265 = vpack.c.bf16 %v235, %v235
    %v266 = vpack.c.bf16 %v237, %v237
    %v267 = vpack.c.bf16 %v245, %v245
    %v268 = vpack.c.bf16 %v253, %v253
    %v269 = vpack.c.bf16 %v252, %v252
    %v270 = vpack.c.bf16 %v254, %v254
    %v271 = vlaneseq
    %v272 = vshrl.u32 %v271, 7
    %v273 = vsub.s32 0, %v272
    %v274 = vrot.slane %v160, %v273
    %v403 = vunpack.c.l.b16 %v32
    %v404 = vunpack.c.l.b16 %v33
    %v405 = vunpack.c.l.b16 %v34
    %v406 = vunpack.c.l.b16 %v35
    %v407 = vunpack.c.l.b16 %v36
    %v408 = vunpack.c.l.b16 %v37
    %v409 = vunpack.c.l.b16 %v38
    %v410 = vunpack.c.l.b16 %v39
    %v411 = vunpack.c.l.b16 %v40
    %v412 = vunpack.c.l.b16 %v41
    %v413 = vunpack.c.l.b16 %v42
    %v414 = vunpack.c.l.b16 %v43
    %v415 = vunpack.c.l.b16 %v44
    %v416 = vunpack.c.l.b16 %v45
    %v417 = vunpack.c.l.b16 %v46
    %v418 = vunpack.c.l.b16 %v47
    %v419 = vunpack.c.l.b16 %v48
    %v420 = vunpack.c.l.b16 %v49
    %v421 = vunpack.c.l.b16 %v50
    %v422 = vunpack.c.l.b16 %v51
    %v423 = vunpack.c.l.b16 %v52
    %v424 = vunpack.c.l.b16 %v53
    %v425 = vunpack.c.l.b16 %v54
    %v426 = vunpack.c.l.b16 %v55
    %v427 = vunpack.c.l.b16 %v56
    %v428 = vunpack.c.l.b16 %v57
    %v429 = vunpack.c.l.b16 %v58
    %v430 = vunpack.c.l.b16 %v59
    %v431 = vunpack.c.l.b16 %v60
    %v432 = vunpack.c.l.b16 %v61
    %v433 = vunpack.c.l.b16 %v62
    %v434 = vunpack.c.l.b16 %v63
    %v435 = vunpack.c.l.b16 %v64
    %v436 = vunpack.c.l.b16 %v65
    %v437 = vunpack.c.l.b16 %v66
    %v438 = vunpack.c.l.b16 %v67
    %v439 = vunpack.c.l.b16 %v68
    %v440 = vunpack.c.l.b16 %v69
    %v441 = vunpack.c.l.b16 %v70
    %v442 = vunpack.c.l.b16 %v71
    %v443 = vunpack.c.l.b16 %v72
    %v444 = vunpack.c.l.b16 %v73
    %v445 = vunpack.c.l.b16 %v74
    %v446 = vunpack.c.l.b16 %v75
    %v447 = vunpack.c.l.b16 %v76
    %v448 = vunpack.c.l.b16 %v77
    %v449 = vunpack.c.l.b16 %v78
    %v450 = vunpack.c.l.b16 %v79
    %v451 = vunpack.c.l.b16 %v80
    %v452 = vunpack.c.l.b16 %v81
    %v453 = vunpack.c.l.b16 %v82
    %v454 = vunpack.c.l.b16 %v83
    %v455 = vunpack.c.l.b16 %v84
    %v456 = vunpack.c.l.b16 %v85
    %v457 = vunpack.c.l.b16 %v86
    %v458 = vunpack.c.l.b16 %v87
    %v459 = vunpack.c.l.b16 %v88
    %v460 = vunpack.c.l.b16 %v89
    %v461 = vunpack.c.l.b16 %v90
    %v462 = vunpack.c.l.b16 %v91
    %v463 = vunpack.c.l.b16 %v92
    %v464 = vunpack.c.l.b16 %v93
    %v465 = vunpack.c.l.b16 %v94
    %v466 = vunpack.c.l.b16 %v95
    %v467 = vunpack.c.l.b16 %v96
    %v468 = vunpack.c.l.b16 %v97
    %v469 = vunpack.c.l.b16 %v98
    %v470 = vunpack.c.l.b16 %v99
    %v471 = vunpack.c.l.b16 %v100
    %v472 = vunpack.c.l.b16 %v101
    %v473 = vunpack.c.l.b16 %v102
    %v474 = vunpack.c.l.b16 %v103
    %v475 = vunpack.c.l.b16 %v104
    %v476 = vunpack.c.l.b16 %v105
    %v477 = vunpack.c.l.b16 %v106
    %v478 = vunpack.c.l.b16 %v107
    %v479 = vunpack.c.l.b16 %v108
    %v480 = vunpack.c.l.b16 %v109
    %v481 = vunpack.c.l.b16 %v110
    %v482 = vunpack.c.l.b16 %v111
    %v483 = vunpack.c.l.b16 %v112
    %v484 = vunpack.c.l.b16 %v113
    %v485 = vunpack.c.l.b16 %v114
    %v486 = vunpack.c.l.b16 %v115
    %v487 = vunpack.c.l.b16 %v116
    %v488 = vunpack.c.l.b16 %v117
    %v489 = vunpack.c.l.b16 %v118
    %v490 = vunpack.c.l.b16 %v119
    %v491 = vunpack.c.l.b16 %v120
    %v492 = vunpack.c.l.b16 %v121
    %v493 = vunpack.c.l.b16 %v122
    %v494 = vunpack.c.l.b16 %v123
    %v495 = vunpack.c.l.b16 %v124
    %v496 = vunpack.c.l.b16 %v125
    %v497 = vunpack.c.l.b16 %v126
    %v498 = vunpack.c.l.b16 %v127
    %v499 = vunpack.c.l.b16 %v128
    %v500 = vunpack.c.l.b16 %v129
    %v501 = vunpack.c.l.b16 %v130
    %v502 = vunpack.c.l.b16 %v131
    %v503 = vunpack.c.l.b16 %v132
    %v504 = vunpack.c.l.b16 %v133
    %v505 = vunpack.c.l.b16 %v134
    %v506 = vunpack.c.l.b16 %v135
    %v507 = vunpack.c.l.b16 %v136
    %v508 = vunpack.c.l.b16 %v137
    %v509 = vunpack.c.l.b16 %v138
    %v510 = vunpack.c.l.b16 %v139
    %v511 = vunpack.c.l.b16 %v140
    %v512 = vunpack.c.l.b16 %v141
    %v513 = vunpack.c.l.b16 %v142
    %v514 = vunpack.c.l.b16 %v143
    %v515 = vunpack.c.l.b16 %v144
    %v516 = vunpack.c.l.b16 %v145
    %v517 = vunpack.c.l.b16 %v146
    %v518 = vunpack.c.l.b16 %v147
    %v519 = vunpack.c.l.b16 %v148
    %v520 = vunpack.c.l.b16 %v149
    %v521 = vunpack.c.l.b16 %v150
    %v522 = vunpack.c.l.b16 %v151
    %v523 = vunpack.c.l.b16 %v152
    %v524 = vunpack.c.l.b16 %v153
    %v525 = vunpack.c.l.b16 %v154
    %v526 = vunpack.c.l.b16 %v155
    %v527 = vunpack.c.l.b16 %v156
    %v528 = vunpack.c.l.b16 %v157
    %v529 = vunpack.c.l.b16 %v158
    %v530 = vunpack.c.l.b16 %v159
    %v531 = vpack.c.b16 %v404, %v403
    %v532 = vpack.c.b16 %v406, %v405
    %v533 = vpack.c.b16 %v408, %v407
    %v534 = vpack.c.b16 %v410, %v409
    %v535 = vpack.c.b16 %v412, %v411
    %v536 = vpack.c.b16 %v414, %v413
    %v537 = vpack.c.b16 %v416, %v415
    %v538 = vpack.c.b16 %v418, %v417
    %v539 = vpack.c.b16 %v420, %v419
    %v540 = vpack.c.b16 %v422, %v421
    %v541 = vpack.c.b16 %v424, %v423
    %v542 = vpack.c.b16 %v426, %v425
    %v543 = vpack.c.b16 %v428, %v427
    %v544 = vpack.c.b16 %v430, %v429
    %v545 = vpack.c.b16 %v432, %v431
    %v546 = vpack.c.b16 %v434, %v433
    %v547 = vpack.c.b16 %v436, %v435
    %v548 = vpack.c.b16 %v438, %v437
    %v549 = vpack.c.b16 %v440, %v439
    %v550 = vpack.c.b16 %v442, %v441
    %v551 = vpack.c.b16 %v444, %v443
    %v552 = vpack.c.b16 %v446, %v445
    %v553 = vpack.c.b16 %v448, %v447
    %v554 = vpack.c.b16 %v450, %v449
    %v555 = vpack.c.b16 %v452, %v451
    %v556 = vpack.c.b16 %v454, %v453
    %v557 = vpack.c.b16 %v456, %v455
    %v558 = vpack.c.b16 %v458, %v457
    %v559 = vpack.c.b16 %v460, %v459
    %v560 = vpack.c.b16 %v462, %v461
    %v561 = vpack.c.b16 %v464, %v463
    %v562 = vpack.c.b16 %v466, %v465
    %v563 = vpack.c.b16 %v468, %v467
    %v564 = vpack.c.b16 %v470, %v469
    %v565 = vpack.c.b16 %v472, %v471
    %v566 = vpack.c.b16 %v474, %v473
    %v567 = vpack.c.b16 %v476, %v475
    %v568 = vpack.c.b16 %v478, %v477
    %v569 = vpack.c.b16 %v480, %v479
    %v570 = vpack.c.b16 %v482, %v481
    %v571 = vpack.c.b16 %v484, %v483
    %v572 = vpack.c.b16 %v486, %v485
    %v573 = vpack.c.b16 %v488, %v487
    %v574 = vpack.c.b16 %v490, %v489
    %v575 = vpack.c.b16 %v492, %v491
    %v576 = vpack.c.b16 %v494, %v493
    %v577 = vpack.c.b16 %v496, %v495
    %v578 = vpack.c.b16 %v498, %v497
    %v579 = vpack.c.b16 %v500, %v499
    %v580 = vpack.c.b16 %v502, %v501
    %v581 = vpack.c.b16 %v504, %v503
    %v582 = vpack.c.b16 %v506, %v505
    %v583 = vpack.c.b16 %v508, %v507
    %v584 = vpack.c.b16 %v510, %v509
    %v585 = vpack.c.b16 %v512, %v511
    %v586 = vpack.c.b16 %v514, %v513
    %v587 = vpack.c.b16 %v516, %v515
    %v588 = vpack.c.b16 %v518, %v517
    %v589 = vpack.c.b16 %v520, %v519
    %v590 = vpack.c.b16 %v522, %v521
    %v591 = vpack.c.b16 %v524, %v523
    %v592 = vpack.c.b16 %v526, %v525
    %v593 = vpack.c.b16 %v528, %v527
    %v594 = vpack.c.b16 %v530, %v529
    %659 = vmatprep.subr.bf16.mxu0 0
    %660 = vmatpush1.bf16.msra.mxu0 %v531
    %661 = vmatprep.subr.bf16.mxu0 0
    %662 = vmatpush1.bf16.msra.mxu0 %v532
    %663 = vmatprep.subr.bf16.mxu0 0
    %664 = vmatpush1.bf16.msra.mxu0 %v533
    %665 = vmatprep.subr.bf16.mxu0 0
    %666 = vmatpush1.bf16.msra.mxu0 %v534
    %667 = vmatprep.subr.bf16.mxu0 0
    %668 = vmatpush1.bf16.msra.mxu0 %v535
    %669 = vmatprep.subr.bf16.mxu0 0
    %670 = vmatpush1.bf16.msra.mxu0 %v536
    %671 = vmatprep.subr.bf16.mxu0 0
    %672 = vmatpush1.bf16.msra.mxu0 %v537
    %673 = vmatprep.subr.bf16.mxu0 0
    %674 = vmatpush1.bf16.msra.mxu0 %v538
    %675 = vmatprep.subr.bf16.mxu0 0
    %676 = vmatpush1.bf16.msra.mxu0 %v539
    %677 = vmatprep.subr.bf16.mxu0 0
    %678 = vmatpush1.bf16.msra.mxu0 %v540
    %679 = vmatprep.subr.bf16.mxu0 0
    %680 = vmatpush1.bf16.msra.mxu0 %v541
    %681 = vmatprep.subr.bf16.mxu0 0
    %682 = vmatpush1.bf16.msra.mxu0 %v542
    %683 = vmatprep.subr.bf16.mxu0 0
    %684 = vmatpush1.bf16.msra.mxu0 %v543
    %685 = vmatprep.subr.bf16.mxu0 0
    %686 = vmatpush1.bf16.msra.mxu0 %v544
    %687 = vmatprep.subr.bf16.mxu0 0
    %688 = vmatpush1.bf16.msra.mxu0 %v545
    %689 = vmatprep.subr.bf16.mxu0 0
    %690 = vmatpush1.bf16.msra.mxu0 %v546
    %691 = vmatprep.mubr.bf16.mxu0 %v210
    %692 = vmatmul.mubr.bf16.gmra.mrb[0].mxu0 %v209
    %v693 = vpop.f32.mrb[0].mxu0
    %v694 = vadd.f32 %v274, %v693
    %v695 = vpop.f32.mrb[0].mxu0
    %v696 = vpop.f32.mrb[0].mxu0
    %v697 = vpop.f32.mrb[0].mxu0
    %698 = vdwg.mxu0
    %699 = vmatprep.subr.bf16.mxu0 0
    %700 = vmatpush1.bf16.msra.mxu0 %v547
    %701 = vmatprep.subr.bf16.mxu0 0
    %702 = vmatpush1.bf16.msra.mxu0 %v548
    %703 = vmatprep.subr.bf16.mxu0 0
    %704 = vmatpush1.bf16.msra.mxu0 %v549
    %705 = vmatprep.subr.bf16.mxu0 0
    %706 = vmatpush1.bf16.msra.mxu0 %v550
    %707 = vmatprep.subr.bf16.mxu0 0
    %708 = vmatpush1.bf16.msra.mxu0 %v551
    %709 = vmatprep.subr.bf16.mxu0 0
    %710 = vmatpush1.bf16.msra.mxu0 %v552
    %711 = vmatprep.subr.bf16.mxu0 0
    %712 = vmatpush1.bf16.msra.mxu0 %v553
    %713 = vmatprep.subr.bf16.mxu0 0
    %714 = vmatpush1.bf16.msra.mxu0 %v554
    %715 = vmatprep.subr.bf16.mxu0 0
    %716 = vmatpush1.bf16.msra.mxu0 %v555
    %717 = vmatprep.subr.bf16.mxu0 0
    %718 = vmatpush1.bf16.msra.mxu0 %v556
    %719 = vmatprep.subr.bf16.mxu0 0
    %720 = vmatpush1.bf16.msra.mxu0 %v557
    %721 = vmatprep.subr.bf16.mxu0 0
    %722 = vmatpush1.bf16.msra.mxu0 %v558
    %723 = vmatprep.subr.bf16.mxu0 0
    %724 = vmatpush1.bf16.msra.mxu0 %v559
    %725 = vmatprep.subr.bf16.mxu0 0
    %726 = vmatpush1.bf16.msra.mxu0 %v560
    %727 = vmatprep.subr.bf16.mxu0 0
    %728 = vmatpush1.bf16.msra.mxu0 %v561
    %729 = vmatprep.subr.bf16.mxu0 0
    %730 = vmatpush1.bf16.msra.mxu0 %v562
    %731 = vmatprep.mubr.bf16.mxu0 %v212
    %732 = vmatmul.mubr.bf16.gmra.mrb[0].mxu0 %v211
    %v733 = vpop.f32.mrb[0].mxu0
    %v734 = vadd.f32 %v694, %v733
    %v735 = vpop.f32.mrb[0].mxu0
    %v736 = vpop.f32.mrb[0].mxu0
    %v737 = vpop.f32.mrb[0].mxu0
    %738 = vdwg.mxu0
    %739 = vmatprep.subr.bf16.mxu0 0
    %740 = vmatpush1.bf16.msra.mxu0 %v563
    %741 = vmatprep.subr.bf16.mxu0 0
    %742 = vmatpush1.bf16.msra.mxu0 %v564
    %743 = vmatprep.subr.bf16.mxu0 0
    %744 = vmatpush1.bf16.msra.mxu0 %v565
    %745 = vmatprep.subr.bf16.mxu0 0
    %746 = vmatpush1.bf16.msra.mxu0 %v566
    %747 = vmatprep.subr.bf16.mxu0 0
    %748 = vmatpush1.bf16.msra.mxu0 %v567
    %749 = vmatprep.subr.bf16.mxu0 0
    %750 = vmatpush1.bf16.msra.mxu0 %v568
    %751 = vmatprep.subr.bf16.mxu0 0
    %752 = vmatpush1.bf16.msra.mxu0 %v569
    %753 = vmatprep.subr.bf16.mxu0 0
    %754 = vmatpush1.bf16.msra.mxu0 %v570
    %755 = vmatprep.subr.bf16.mxu0 0
    %756 = vmatpush1.bf16.msra.mxu0 %v571
    %757 = vmatprep.subr.bf16.mxu0 0
    %758 = vmatpush1.bf16.msra.mxu0 %v572
    %759 = vmatprep.subr.bf16.mxu0 0
    %760 = vmatpush1.bf16.msra.mxu0 %v573
    %761 = vmatprep.subr.bf16.mxu0 0
    %762 = vmatpush1.bf16.msra.mxu0 %v574
    %763 = vmatprep.subr.bf16.mxu0 0
    %764 = vmatpush1.bf16.msra.mxu0 %v575
    %765 = vmatprep.subr.bf16.mxu0 0
    %766 = vmatpush1.bf16.msra.mxu0 %v576
    %767 = vmatprep.subr.bf16.mxu0 0
    %768 = vmatpush1.bf16.msra.mxu0 %v577
    %769 = vmatprep.subr.bf16.mxu0 0
    %770 = vmatpush1.bf16.msra.mxu0 %v578
    %771 = vmatprep.mubr.bf16.mxu0 %v214
    %772 = vmatmul.mubr.bf16.gmra.mrb[0].mxu0 %v213
    %v773 = vpop.f32.mrb[0].mxu0
    %v774 = vadd.f32 %v734, %v773
    %v775 = vpop.f32.mrb[0].mxu0
    %v776 = vpop.f32.mrb[0].mxu0
    %v777 = vpop.f32.mrb[0].mxu0
    %778 = vdwg.mxu0
    %779 = vmatprep.subr.bf16.mxu0 0
    %780 = vmatpush1.bf16.msra.mxu0 %v579
    %781 = vmatprep.subr.bf16.mxu0 0
    %782 = vmatpush1.bf16.msra.mxu0 %v580
    %783 = vmatprep.subr.bf16.mxu0 0
    %784 = vmatpush1.bf16.msra.mxu0 %v581
    %785 = vmatprep.subr.bf16.mxu0 0
    %786 = vmatpush1.bf16.msra.mxu0 %v582
    %787 = vmatprep.subr.bf16.mxu0 0
    %788 = vmatpush1.bf16.msra.mxu0 %v583
    %789 = vmatprep.subr.bf16.mxu0 0
    %790 = vmatpush1.bf16.msra.mxu0 %v584
    %791 = vmatprep.subr.bf16.mxu0 0
    %792 = vmatpush1.bf16.msra.mxu0 %v585
    %793 = vmatprep.subr.bf16.mxu0 0
    %794 = vmatpush1.bf16.msra.mxu0 %v586
    %795 = vmatprep.subr.bf16.mxu0 0
    %796 = vmatpush1.bf16.msra.mxu0 %v587
    %797 = vmatprep.subr.bf16.mxu0 0
    %798 = vmatpush1.bf16.msra.mxu0 %v588
    %799 = vmatprep.subr.bf16.mxu0 0
    %800 = vmatpush1.bf16.msra.mxu0 %v589
    %801 = vmatprep.subr.bf16.mxu0 0
    %802 = vmatpush1.bf16.msra.mxu0 %v590
    %803 = vmatprep.subr.bf16.mxu0 0
    %804 = vmatpush1.bf16.msra.mxu0 %v591
    %805 = vmatprep.subr.bf16.mxu0 0
    %806 = vmatpush1.bf16.msra.mxu0 %v592
    %807 = vmatprep.subr.bf16.mxu0 0
    %808 = vmatpush1.bf16.msra.mxu0 %v593
    %809 = vmatprep.subr.bf16.mxu0 0
    %810 = vmatpush1.bf16.msra.mxu0 %v594
    %811 = vmatprep.mubr.bf16.mxu0 %v216
    %812 = vmatmul.mubr.bf16.gmra.mrb[0].mxu0 %v215
    %v813 = vpop.f32.mrb[0].mxu0
    %v814 = vadd.f32 %v774, %v813
    %v815 = vpop.f32.mrb[0].mxu0
    %v816 = vpop.f32.mrb[0].mxu0
    %v817 = vpop.f32.mrb[0].mxu0
    %818 = vdwg.mxu0
    %v819 = vmax.f32 %v814, 0.0
    %820 = vmatprep.subr.bf16.mxu0 0
    %821 = vmatpush1.bf16.msra.mxu0 %v531
    %822 = vmatprep.subr.bf16.mxu0 0
    %823 = vmatpush1.bf16.msra.mxu0 %v532
    %824 = vmatprep.subr.bf16.mxu0 0
    %825 = vmatpush1.bf16.msra.mxu0 %v533
    %826 = vmatprep.subr.bf16.mxu0 0
    %827 = vmatpush1.bf16.msra.mxu0 %v534
    %828 = vmatprep.subr.bf16.mxu0 0
    %829 = vmatpush1.bf16.msra.mxu0 %v535
    %830 = vmatprep.subr.bf16.mxu0 0
    %831 = vmatpush1.bf16.msra.mxu0 %v536
    %832 = vmatprep.subr.bf16.mxu0 0
    %833 = vmatpush1.bf16.msra.mxu0 %v537
    %834 = vmatprep.subr.bf16.mxu0 0
    %835 = vmatpush1.bf16.msra.mxu0 %v538
    %836 = vmatprep.subr.bf16.mxu0 0
    %837 = vmatpush1.bf16.msra.mxu0 %v539
    %838 = vmatprep.subr.bf16.mxu0 0
    %839 = vmatpush1.bf16.msra.mxu0 %v540
    %840 = vmatprep.subr.bf16.mxu0 0
    %841 = vmatpush1.bf16.msra.mxu0 %v541
    %842 = vmatprep.subr.bf16.mxu0 0
    %843 = vmatpush1.bf16.msra.mxu0 %v542
    %844 = vmatprep.subr.bf16.mxu0 0
    %845 = vmatpush1.bf16.msra.mxu0 %v543
    %846 = vmatprep.subr.bf16.mxu0 0
    %847 = vmatpush1.bf16.msra.mxu0 %v544
    %848 = vmatprep.subr.bf16.mxu0 0
    %849 = vmatpush1.bf16.msra.mxu0 %v545
    %850 = vmatprep.subr.bf16.mxu0 0
    %851 = vmatpush1.bf16.msra.mxu0 %v546
    %852 = vmatprep.mubr.bf16.mxu0 %v264
    %853 = vmatmul.mubr.bf16.gmra.mrb[0].mxu0 %v263
    %v854 = vpop.f32.mrb[0].mxu0
    %v855 = vadd.f32 %v274, %v854
    %v856 = vpop.f32.mrb[0].mxu0
    %v857 = vpop.f32.mrb[0].mxu0
    %v858 = vpop.f32.mrb[0].mxu0
    %859 = vdwg.mxu0
    %860 = vmatprep.subr.bf16.mxu0 0
    %861 = vmatpush1.bf16.msra.mxu0 %v547
    %862 = vmatprep.subr.bf16.mxu0 0
    %863 = vmatpush1.bf16.msra.mxu0 %v548
    %864 = vmatprep.subr.bf16.mxu0 0
    %865 = vmatpush1.bf16.msra.mxu0 %v549
    %866 = vmatprep.subr.bf16.mxu0 0
    %867 = vmatpush1.bf16.msra.mxu0 %v550
    %868 = vmatprep.subr.bf16.mxu0 0
    %869 = vmatpush1.bf16.msra.mxu0 %v551
    %870 = vmatprep.subr.bf16.mxu0 0
    %871 = vmatpush1.bf16.msra.mxu0 %v552
    %872 = vmatprep.subr.bf16.mxu0 0
    %873 = vmatpush1.bf16.msra.mxu0 %v553
    %874 = vmatprep.subr.bf16.mxu0 0
    %875 = vmatpush1.bf16.msra.mxu0 %v554
    %876 = vmatprep.subr.bf16.mxu0 0
    %877 = vmatpush1.bf16.msra.mxu0 %v555
    %878 = vmatprep.subr.bf16.mxu0 0
    %879 = vmatpush1.bf16.msra.mxu0 %v556
    %880 = vmatprep.subr.bf16.mxu0 0
    %881 = vmatpush1.bf16.msra.mxu0 %v557
    %882 = vmatprep.subr.bf16.mxu0 0
    %883 = vmatpush1.bf16.msra.mxu0 %v558
    %884 = vmatprep.subr.bf16.mxu0 0
    %885 = vmatpush1.bf16.msra.mxu0 %v559
    %886 = vmatprep.subr.bf16.mxu0 0
    %887 = vmatpush1.bf16.msra.mxu0 %v560
    %888 = vmatprep.subr.bf16.mxu0 0
    %889 = vmatpush1.bf16.msra.mxu0 %v561
    %890 = vmatprep.subr.bf16.mxu0 0
    %891 = vmatpush1.bf16.msra.mxu0 %v562
    %892 = vmatprep.mubr.bf16.mxu0 %v266
    %893 = vmatmul.mubr.bf16.gmra.mrb[0].mxu0 %v265
    %v894 = vpop.f32.mrb[0].mxu0
    %v895 = vadd.f32 %v855, %v894
    %v896 = vpop.f32.mrb[0].mxu0
    %v897 = vpop.f32.mrb[0].mxu0
    %v898 = vpop.f32.mrb[0].mxu0
    %899 = vdwg.mxu0
    %900 = vmatprep.subr.bf16.mxu0 0
    %901 = vmatpush1.bf16.msra.mxu0 %v563
    %902 = vmatprep.subr.bf16.mxu0 0
    %903 = vmatpush1.bf16.msra.mxu0 %v564
    %904 = vmatprep.subr.bf16.mxu0 0
    %905 = vmatpush1.bf16.msra.mxu0 %v565
    %906 = vmatprep.subr.bf16.mxu0 0
    %907 = vmatpush1.bf16.msra.mxu0 %v566
    %908 = vmatprep.subr.bf16.mxu0 0
    %909 = vmatpush1.bf16.msra.mxu0 %v567
    %910 = vmatprep.subr.bf16.mxu0 0
    %911 = vmatpush1.bf16.msra.mxu0 %v568
    %912 = vmatprep.subr.bf16.mxu0 0
    %913 = vmatpush1.bf16.msra.mxu0 %v569
    %914 = vmatprep.subr.bf16.mxu0 0
    %915 = vmatpush1.bf16.msra.mxu0 %v570
    %916 = vmatprep.subr.bf16.mxu0 0
    %917 = vmatpush1.bf16.msra.mxu0 %v571
    %918 = vmatprep.subr.bf16.mxu0 0
    %919 = vmatpush1.bf16.msra.mxu0 %v572
    %920 = vmatprep.subr.bf16.mxu0 0
    %921 = vmatpush1.bf16.msra.mxu0 %v573
    %922 = vmatprep.subr.bf16.mxu0 0
    %923 = vmatpush1.bf16.msra.mxu0 %v574
    %924 = vmatprep.subr.bf16.mxu0 0
    %925 = vmatpush1.bf16.msra.mxu0 %v575
    %926 = vmatprep.subr.bf16.mxu0 0
    %927 = vmatpush1.bf16.msra.mxu0 %v576
    %928 = vmatprep.subr.bf16.mxu0 0
    %929 = vmatpush1.bf16.msra.mxu0 %v577
    %930 = vmatprep.subr.bf16.mxu0 0
    %931 = vmatpush1.bf16.msra.mxu0 %v578
    %932 = vmatprep.mubr.bf16.mxu0 %v268
    %933 = vmatmul.mubr.bf16.gmra.mrb[0].mxu0 %v267
    %v934 = vpop.f32.mrb[0].mxu0
    %v935 = vadd.f32 %v895, %v934
    %v936 = vpop.f32.mrb[0].mxu0
    %v937 = vpop.f32.mrb[0].mxu0
    %v938 = vpop.f32.mrb[0].mxu0
    %939 = vdwg.mxu0
    %940 = vmatprep.subr.bf16.mxu0 0
    %941 = vmatpush1.bf16.msra.mxu0 %v579
    %942 = vmatprep.subr.bf16.mxu0 0
    %943 = vmatpush1.bf16.msra.mxu0 %v580
    %944 = vmatprep.subr.bf16.mxu0 0
    %945 = vmatpush1.bf16.msra.mxu0 %v581
    %946 = vmatprep.subr.bf16.mxu0 0
    %947 = vmatpush1.bf16.msra.mxu0 %v582
    %948 = vmatprep.subr.bf16.mxu0 0
    %949 = vmatpush1.bf16.msra.mxu0 %v583
    %950 = vmatprep.subr.bf16.mxu0 0
    %951 = vmatpush1.bf16.msra.mxu0 %v584
    %952 = vmatprep.subr.bf16.mxu0 0
    %953 = vmatpush1.bf16.msra.mxu0 %v585
    %954 = vmatprep.subr.bf16.mxu0 0
    %955 = vmatpush1.bf16.msra.mxu0 %v586
    %956 = vmatprep.subr.bf16.mxu0 0
    %957 = vmatpush1.bf16.msra.mxu0 %v587
    %958 = vmatprep.subr.bf16.mxu0 0
    %959 = vmatpush1.bf16.msra.mxu0 %v588
    %960 = vmatprep.subr.bf16.mxu0 0
    %961 = vmatpush1.bf16.msra.mxu0 %v589
    %962 = vmatprep.subr.bf16.mxu0 0
    %963 = vmatpush1.bf16.msra.mxu0 %v590
    %964 = vmatprep.subr.bf16.mxu0 0
    %965 = vmatpush1.bf16.msra.mxu0 %v591
    %966 = vmatprep.subr.bf16.mxu0 0
    %967 = vmatpush1.bf16.msra.mxu0 %v592
    %968 = vmatprep.subr.bf16.mxu0 0
    %969 = vmatpush1.bf16.msra.mxu0 %v593
    %970 = vmatprep.subr.bf16.mxu0 0
    %971 = vmatpush1.bf16.msra.mxu0 %v594
    %972 = vmatprep.mubr.bf16.mxu0 %v270
    %973 = vmatmul.mubr.bf16.gmra.mrb[0].mxu0 %v269
    %v974 = vpop.f32.mrb[0].mxu0
    %v975 = vadd.f32 %v935, %v974
    %v976 = vpop.f32.mrb[0].mxu0
    %v977 = vpop.f32.mrb[0].mxu0
    %v978 = vpop.f32.mrb[0].mxu0
    %979 = vdwg.mxu0
    %v980 = vmax.f32 %v975, 0.0
    %v981 = vlaneseq
    %v982 = vshrl.u32 %v981, 7
    %v983 = vsub.s32 0, %v982
    %v984 = vrot.slane %v161, %v983
    %v985 = vmul.f32 %v819, %v984
    %vm986 = vcmask 1041408
    %v987 = vsel %vm986, %v985, 0.0
    %988 = vadd.xlane.f32.xlu0 %v987
    %v989 = vpop.xlane.xlu0 %988
    %v990 = vlaneseq
    %v991 = vshrl.u32 %v990, 7
    %v992 = vsub.s32 0, %v991
    %v993 = vrot.slane %v162, %v992
    %v994 = vmul.f32 %v980, %v993
    %v995 = vsel %vm986, %v994, 0.0
    %996 = vadd.xlane.f32.xlu0 %v995
    %v997 = vpop.xlane.xlu0 %996
    %v998 = vadd.f32 %v989, %v997
    %v999 = vand.u32 2147483647, %v998
    %v1000 = vsub.f32 0.0, %v999
    %v1001 = vmul.f32 %v1000, 1.442695
    %v1002 = vpow.pop %v1001
    %v1003 = vadd.f32 %v1002, 1.0
    %v1004 = vrcp.pop %v1003
    %v1005 = vmul.f32 1.0, %v1004
    %vm1006 = vcmp.ge.f32.partialorder %v998, 0.0
    %v1007 = vmul.f32 %v1002, %v1005
    %v1008 = vsel %vm1006, %v1005, %v1007
    %1009 = vst [vmem:[%s4] sm:$0x3] %v1008
    // Predicated region
    $region22: #{siamese_forward.1} parent=1 // pred_check
      _
    $region23: #{siamese_forward.1} parent=1 // pred_check_branch
      %1011 = sbr.rel (0) target = $region25
    $region24: #{siamese_forward.1} parent=1 // pred_region
      _
    $region25: #{siamese_forward.1} parent=1 // pred_fallthru
      _
    // Predicated region
    $region26: #{siamese_forward.1} parent=1 // pred_check
      _
    $region27: #{siamese_forward.1} parent=1 // pred_check_branch
      %1013 = sbr.rel (0) target = $region29
    $region28: #{siamese_forward.1} parent=1 // pred_region
      _
    $region29: #{siamese_forward.1} parent=1 // pred_fallthru
      _
    %1014 = vsyncpa [#allocation3], 1

</llo_original>
